<compile_context>
chip_gen: v7x
topology: tpu7x:2x2x1
jax: 0.10.0
libtpu: 0.0.40
codegen_flags: <defaults>
</compile_context>

<pallas_src>
import jax
import jax.numpy as jnp
from jax.experimental import pallas as pl
from jax.experimental.pallas import tpu as pltpu

LEAKY_SLOPE = 0.2
HIDDEN = 128
N_PAD = 128          # padded width of the final (128 -> 1) layer


def _round_up(n, m):
    return ((n + m - 1) // m) * m


def _leaky_relu(x, slope):
    return jnp.where(x > 0, x, slope * x)


def discriminator_kernel(x_ref, w1_ref, b1_ref, w2_ref, b2_ref, w3_ref, b3_ref,
                         o_ref):
    # Layer 1: (block_b, Dp) @ (Dp, 128) -> f32 accumulate, f32 epilogue.
    h1 = jnp.dot(x_ref[...], w1_ref[...],
                 preferred_element_type=jnp.float32) + b1_ref[...]
    h1 = _leaky_relu(h1, LEAKY_SLOPE)            # Dropout (eval) == identity

    # Layer 2: cast activations to matmul dtype only at the dot input.
    h2 = jnp.dot(h1.astype(w2_ref.dtype), w2_ref[...],
                 preferred_element_type=jnp.float32) + b2_ref[...]
    h2 = _leaky_relu(h2, LEAKY_SLOPE)            # Dropout (eval) == identity

    # Layer 3: N padded to 128 -> full MXU pass + lane-dense output store.
    logits = jnp.dot(h2.astype(w3_ref.dtype), w3_ref[...],
                     preferred_element_type=jnp.float32) + b3_ref[...]

    # sigmoid (GANType.GAN branch): exp + approx reciprocal both run on the EUP.
    o_ref[...] = pl.reciprocal(1.0 + jnp.exp(-logits),
                               approx=True).astype(o_ref.dtype)


def discriminator_forward(x, params, *, block_b=None, use_bf16=True):
    """x: [B, input_size] float32. Returns [B, 1] float32 probabilities."""
    w1, b1, w2, b2, w3, b3 = params
    B, D = x.shape
    H = w1.shape[1]                       # 128

    # --- pad feature dim (K) to a multiple of 128 (lane-dense, aligned) ---
    Dp = _round_up(max(D, 128), 128)
    if Dp != D:
        x = jnp.pad(x, ((0, 0), (0, Dp - D)))
        w1 = jnp.pad(w1, ((0, Dp - D), (0, 0)))

    # --- pad final layer N: 1 -> 128 so the output store is lane-dense ---
    w3 = jnp.pad(w3, ((0, 0), (0, N_PAD - w3.shape[1])))
    b3 = jnp.pad(b3, ((0, 0), (0, N_PAD - b3.shape[1])))

    # --- pick a large batch tile; pad batch to a multiple of it ---
    if block_b is None:
        block_b = min(256, _round_up(B, 8))
    block_b = _round_up(block_b, 8)
    Bp = _round_up(B, block_b)
    if Bp != B:
        x = jnp.pad(x, ((0, Bp - B), (0, 0)))

    # --- dtype: bf16 matmul inputs, f32 accumulation / biases / epilogue ---
    mm_dtype = jnp.bfloat16 if use_bf16 else jnp.float32
    x = x.astype(mm_dtype)
    w1 = w1.astype(mm_dtype)
    w2 = w2.astype(mm_dtype)
    w3 = w3.astype(mm_dtype)
    b1 = b1.astype(jnp.float32)
    b2 = b2.astype(jnp.float32)
    b3 = b3.astype(jnp.float32)

    grid = (Bp // block_b,)
    full = lambda i: (0, 0)   # weights/biases: same (whole) block every step

    out = pl.pallas_call(
        discriminator_kernel,
        out_shape=jax.ShapeDtypeStruct((Bp, N_PAD), jnp.float32),
        grid_spec=pltpu.PrefetchScalarGridSpec(
            num_scalar_prefetch=0,
            grid=grid,
            in_specs=[
                pl.BlockSpec((block_b, Dp), lambda i: (i, 0)),   # x tile
                pl.BlockSpec((Dp, H), full),                     # w1
                pl.BlockSpec((1, H), full),                      # b1
                pl.BlockSpec((H, H), full),                      # w2
                pl.BlockSpec((1, H), full),                      # b2
                pl.BlockSpec((H, N_PAD), full),                  # w3 (N padded)
                pl.BlockSpec((1, N_PAD), full),                  # b3 (N padded)
            ],
            out_specs=pl.BlockSpec((block_b, N_PAD), lambda i: (i, 0)),
        ),
        compiler_params=pltpu.CompilerParams(
            dimension_semantics=("parallel",)),
    )(x, w1, b1, w2, b2, w3, b3)

    # strip batch padding and keep only the real output column
    return out[:B, :1]


def init_params(key, input_size, hidden=HIDDEN):
    """Deterministic synthetic parameters (shapes match the PyTorch module)."""
    ks = jax.random.split(key, 6)
    # stored as [in, out] so the kernel computes x @ W + b
    w1 = jax.random.normal(ks[0], (input_size, hidden), jnp.float32) * 0.1
    b1 = jax.random.normal(ks[1], (1, hidden), jnp.float32) * 0.1
    w2 = jax.random.normal(ks[2], (hidden, hidden), jnp.float32) * 0.1
    b2 = jax.random.normal(ks[3], (1, hidden), jnp.float32) * 0.1
    w3 = jax.random.normal(ks[4], (hidden, 1), jnp.float32) * 0.1
    b3 = jax.random.normal(ks[5], (1, 1), jnp.float32) * 0.1
    return (w1, b1, w2, b2, w3, b3)


def reference_forward(x, params):
    """Pure-JAX f32 reference for correctness check."""
    w1, b1, w2, b2, w3, b3 = params
    h1 = x @ w1 + b1
    h1 = jnp.where(h1 > 0, h1, LEAKY_SLOPE * h1)
    h2 = h1 @ w2 + b2
    h2 = jnp.where(h2 > 0, h2, LEAKY_SLOPE * h2)
    return jax.nn.sigmoid(h2 @ w3 + b3)


if __name__ == "__main__":
    key = jax.random.PRNGKey(0)
    k_x, k_p = jax.random.split(key)

    batch = 64
    input_size = 32

    x = jax.random.normal(k_x, (batch, input_size), jnp.float32)
    params = init_params(k_p, input_size)
    ref = reference_forward(x, params)

    # default path: bf16 MXU inputs, f32 epilogue
    out = jax.block_until_ready(discriminator_forward(x, params))
    assert out.shape == (batch, 1)
    assert jnp.allclose(out, ref, atol=2e-2, rtol=0), "bf16 path mismatch vs reference"

    # f32 path: tighter check of the kernel structure itself
    out_f32 = jax.block_until_ready(discriminator_forward(x, params, use_bf16=False))
    assert jnp.allclose(out_f32, ref, atol=5e-3, rtol=0), "f32 path mismatch vs reference"

    print("KERNEL_OK")
</pallas_src>

<mosaic_0001>
module attributes {stable_mosaic.version = 11 : i64} {
  func.func @discriminator_kernel(%arg0: i32, %arg1: memref<64x128xbf16, #tpu.memory_space<vmem>>, %arg2: memref<128x128xbf16, #tpu.memory_space<vmem>>, %arg3: memref<1x128xf32, #tpu.memory_space<vmem>>, %arg4: memref<128x128xbf16, #tpu.memory_space<vmem>>, %arg5: memref<1x128xf32, #tpu.memory_space<vmem>>, %arg6: memref<128x128xbf16, #tpu.memory_space<vmem>>, %arg7: memref<1x128xf32, #tpu.memory_space<vmem>>, %arg8: memref<64x128xf32, #tpu.memory_space<vmem>>) attributes {dimension_semantics = [#tpu.dimension_semantics<parallel>], iteration_bounds = array<i64: 1>, scalar_prefetch = 0 : i64, scratch_operands = 0 : i64, tpu.core_type = #tpu.core_type<tc>, window_params = [{transform_indices = @transform_0, window_bounds = array<i64: 64, 128>}, {pipeline_mode = #tpu.pipeline_mode<synchronous>, transform_indices = @transform_1, window_bounds = array<i64: 128, 128>}, {pipeline_mode = #tpu.pipeline_mode<synchronous>, transform_indices = @transform_2, window_bounds = array<i64: 1, 128>}, {pipeline_mode = #tpu.pipeline_mode<synchronous>, transform_indices = @transform_3, window_bounds = array<i64: 128, 128>}, {pipeline_mode = #tpu.pipeline_mode<synchronous>, transform_indices = @transform_4, window_bounds = array<i64: 1, 128>}, {pipeline_mode = #tpu.pipeline_mode<synchronous>, transform_indices = @transform_5, window_bounds = array<i64: 128, 128>}, {pipeline_mode = #tpu.pipeline_mode<synchronous>, transform_indices = @transform_6, window_bounds = array<i64: 1, 128>}, {transform_indices = @transform_7, window_bounds = array<i64: 64, 128>}]} {
    %c0 = arith.constant 0 : index
    %c0_0 = arith.constant 0 : index
    %0 = vector.load %arg1[%c0, %c0_0] : memref<64x128xbf16, #tpu.memory_space<vmem>>, vector<64x128xbf16>
    %c0_1 = arith.constant 0 : index
    %c0_2 = arith.constant 0 : index
    %1 = vector.load %arg2[%c0_1, %c0_2] : memref<128x128xbf16, #tpu.memory_space<vmem>>, vector<128x128xbf16>
    %cst = arith.constant dense<0.000000e+00> : vector<64x128xf32>
    %2 = tpu.matmul %0, %1, %cst {dimension_numbers = #tpu.dot_dimension_numbers<[1], [0], [0], [1], [0, 0, 1, 1], [], []>} : vector<64x128xbf16>, vector<128x128xbf16>, vector<64x128xf32> -> vector<64x128xf32>
    %c0_3 = arith.constant 0 : index
    %c0_4 = arith.constant 0 : index
    %3 = vector.load %arg3[%c0_3, %c0_4] : memref<1x128xf32, #tpu.memory_space<vmem>>, vector<1x128xf32>
    %4 = vector.broadcast %3 : vector<1x128xf32> to vector<64x128xf32>
    %5 = arith.addf %2, %4 : vector<64x128xf32>
    %cst_5 = arith.constant 0.000000e+00 : f32
    %6 = vector.broadcast %cst_5 : f32 to vector<64x128xf32>
    %7 = arith.cmpf ogt, %5, %6 : vector<64x128xf32>
    %cst_6 = arith.constant 2.000000e-01 : f32
    %8 = vector.broadcast %cst_6 : f32 to vector<64x128xf32>
    %9 = arith.mulf %8, %5 : vector<64x128xf32>
    %10 = arith.select %7, %5, %9 : vector<64x128xi1>, vector<64x128xf32>
    %11 = arith.truncf %10 : vector<64x128xf32> to vector<64x128xbf16>
    %c0_7 = arith.constant 0 : index
    %c0_8 = arith.constant 0 : index
    %12 = vector.load %arg4[%c0_7, %c0_8] : memref<128x128xbf16, #tpu.memory_space<vmem>>, vector<128x128xbf16>
    %cst_9 = arith.constant dense<0.000000e+00> : vector<64x128xf32>
    %13 = tpu.matmul %11, %12, %cst_9 {dimension_numbers = #tpu.dot_dimension_numbers<[1], [0], [0], [1], [0, 0, 1, 1], [], []>} : vector<64x128xbf16>, vector<128x128xbf16>, vector<64x128xf32> -> vector<64x128xf32>
    %c0_10 = arith.constant 0 : index
    %c0_11 = arith.constant 0 : index
    %14 = vector.load %arg5[%c0_10, %c0_11] : memref<1x128xf32, #tpu.memory_space<vmem>>, vector<1x128xf32>
    %15 = vector.broadcast %14 : vector<1x128xf32> to vector<64x128xf32>
    %16 = arith.addf %13, %15 : vector<64x128xf32>
    %cst_12 = arith.constant 0.000000e+00 : f32
    %17 = vector.broadcast %cst_12 : f32 to vector<64x128xf32>
    %18 = arith.cmpf ogt, %16, %17 : vector<64x128xf32>
    %cst_13 = arith.constant 2.000000e-01 : f32
    %19 = vector.broadcast %cst_13 : f32 to vector<64x128xf32>
    %20 = arith.mulf %19, %16 : vector<64x128xf32>
    %21 = arith.select %18, %16, %20 : vector<64x128xi1>, vector<64x128xf32>
    %22 = arith.truncf %21 : vector<64x128xf32> to vector<64x128xbf16>
    %c0_14 = arith.constant 0 : index
    %c0_15 = arith.constant 0 : index
    %23 = vector.load %arg6[%c0_14, %c0_15] : memref<128x128xbf16, #tpu.memory_space<vmem>>, vector<128x128xbf16>
    %cst_16 = arith.constant dense<0.000000e+00> : vector<64x128xf32>
    %24 = tpu.matmul %22, %23, %cst_16 {dimension_numbers = #tpu.dot_dimension_numbers<[1], [0], [0], [1], [0, 0, 1, 1], [], []>} : vector<64x128xbf16>, vector<128x128xbf16>, vector<64x128xf32> -> vector<64x128xf32>
    %c0_17 = arith.constant 0 : index
    %c0_18 = arith.constant 0 : index
    %25 = vector.load %arg7[%c0_17, %c0_18] : memref<1x128xf32, #tpu.memory_space<vmem>>, vector<1x128xf32>
    %26 = vector.broadcast %25 : vector<1x128xf32> to vector<64x128xf32>
    %27 = arith.addf %24, %26 : vector<64x128xf32>
    %cst_19 = arith.constant 0.000000e+00 : f32
    %28 = vector.broadcast %cst_19 : f32 to vector<64x128xf32>
    %29 = arith.subf %28, %27 : vector<64x128xf32>
    %30 = math.exp %29 : vector<64x128xf32>
    %cst_20 = arith.constant 1.000000e+00 : f32
    %31 = vector.broadcast %cst_20 : f32 to vector<64x128xf32>
    %32 = arith.addf %31, %30 : vector<64x128xf32>
    %33 = tpu.reciprocal %32 {approx = true} : vector<64x128xf32> -> vector<64x128xf32>
    %c0_21 = arith.constant 0 : index
    %c0_22 = arith.constant 0 : index
    %34 = vector.load %arg8[%c0_21, %c0_22] : memref<64x128xf32, #tpu.memory_space<vmem>>, vector<64x128xf32>
    tpu.vector_store %arg8[%c0_21, %c0_22], %33 {strides = array<i32>} : memref<64x128xf32, #tpu.memory_space<vmem>>, vector<64x128xf32>,
    return
  }
  func.func @transform_0(%arg0: i32) -> (i32, i32) {
    %c0_i32 = arith.constant 0 : i32
    %c0_i32_0 = arith.constant 0 : i32
    return %arg0, %c0_i32 : i32, i32
  }
  func.func @transform_1(%arg0: i32) -> (i32, i32) {
    %c0_i32 = arith.constant 0 : i32
    %c0_i32_0 = arith.constant 0 : i32
    %c0_i32_1 = arith.constant 0 : i32
    return %c0_i32, %c0_i32_0 : i32, i32
  }
  func.func @transform_2(%arg0: i32) -> (i32, i32) {
    %c0_i32 = arith.constant 0 : i32
    %c0_i32_0 = arith.constant 0 : i32
    %c0_i32_1 = arith.constant 0 : i32
    return %c0_i32, %c0_i32_0 : i32, i32
  }
  func.func @transform_3(%arg0: i32) -> (i32, i32) {
    %c0_i32 = arith.constant 0 : i32
    %c0_i32_0 = arith.constant 0 : i32
    %c0_i32_1 = arith.constant 0 : i32
    return %c0_i32, %c0_i32_0 : i32, i32
  }
  func.func @transform_4(%arg0: i32) -> (i32, i32) {
    %c0_i32 = arith.constant 0 : i32
    %c0_i32_0 = arith.constant 0 : i32
    %c0_i32_1 = arith.constant 0 : i32
    return %c0_i32, %c0_i32_0 : i32, i32
  }
  func.func @transform_5(%arg0: i32) -> (i32, i32) {
    %c0_i32 = arith.constant 0 : i32
    %c0_i32_0 = arith.constant 0 : i32
    %c0_i32_1 = arith.constant 0 : i32
    return %c0_i32, %c0_i32_0 : i32, i32
  }
  func.func @transform_6(%arg0: i32) -> (i32, i32) {
    %c0_i32 = arith.constant 0 : i32
    %c0_i32_0 = arith.constant 0 : i32
    %c0_i32_1 = arith.constant 0 : i32
    return %c0_i32, %c0_i32_0 : i32, i32
  }
  func.func @transform_7(%arg0: i32) -> (i32, i32) {
    %c0_i32 = arith.constant 0 : i32
    %c0_i32_0 = arith.constant 0 : i32
    return %arg0, %c0_i32 : i32, i32
  }
}

</mosaic_0001>

<llo_original>
// kernel: tpu_custom_call.1
$region0: #{tpu_custom_call.1}
  #allocation0 [shape = 'u32[]', space=smem, size = 0x4, offset = 0x4, fixed_abs, tag = 'smem constant byte address 0x4 - core index']
  #allocation1 [shape = 'u32[144,128]{1,0:T(1,128)}', space=vmem, size = 0x12000, scoped, tag = 'internal scratch']
  %s0 = inlined_call_operand.hbm [shape: bf16[64,128], index: 0, kind: input, shape index: {}]
  %s1 = inlined_call_operand.hbm [shape: bf16[128,128], index: 1, kind: input, shape index: {}]
  %s2 = inlined_call_operand.vmem [shape: f32[1,128], index: 2, kind: input, shape index: {}]
  %s3 = inlined_call_operand.hbm [shape: bf16[128,128], index: 3, kind: input, shape index: {}]
  %s4 = inlined_call_operand.vmem [shape: f32[1,128], index: 4, kind: input, shape index: {}]
  %s5 = inlined_call_operand.hbm [shape: bf16[128,128], index: 5, kind: input, shape index: {}]
  %s6 = inlined_call_operand.vmem [shape: f32[1,128], index: 6, kind: input, shape index: {}]
  %s7 = inlined_call_operand.hbm [shape: f32[64,128], index: 7, kind: output, shape index: {}]
  %s8 = sld [smem:[#allocation0]]
  $region54: #{tpu_custom_call.1} parent=0
    _
  %s10 = ssub.s32 1, %s8
  %s11 = scalar_select 0, %s10, %s8
  $region1: #{tpu_custom_call.1} parent=0
    #allocation2 [shape = 'u8[16384]{0}', space=vmem, size = 0x4000, scoped, tag = 'input window, operand 0, single buffered']
    #allocation3 [shape = 's32[1]{0}', space=sflag, size = 0x4, scoped, tag = 'scoped memory for tpu_custom_call.1']
    #allocation4 [shape = 's32[1]{0}', space=sflag, size = 0x4, scoped, tag = 'scoped memory for tpu_custom_call.1']
    #allocation5 [shape = 'u8[32768]{0}', space=vmem, size = 0x8000, scoped, tag = 'input window, operand 1, single buffered']
    #allocation6 [shape = 's32[1]{0}', space=sflag, size = 0x4, scoped, tag = 'scoped memory for tpu_custom_call.1']
    #allocation7 [shape = 'u8[32768]{0}', space=vmem, size = 0x8000, scoped, tag = 'input window, operand 3, single buffered']
    #allocation8 [shape = 'u8[32768]{0}', space=vmem, size = 0x8000, scoped, tag = 'input window, operand 5, single buffered']
    #allocation9 [shape = 's32[1]{0}', space=sflag, size = 0x4, scoped, tag = 'scoped memory for tpu_custom_call.1']
    #allocation10 [shape = 'u8[32768]{0}', space=vmem, size = 0x8000, scoped, tag = 'output window, operand 0, single buffered']
    %12 = vsyncpa [#allocation3], 0
    %13 = vsyncpa [#allocation6], 0
    %14 = vsyncpa [#allocation9], 0
    %15 = vsyncpa [#allocation4], 0
    // Predicated region
    $region2: #{tpu_custom_call.1} parent=1 // pred_check
      _
    $region3: #{tpu_custom_call.1} parent=1 // pred_check_branch
      %17 = sbr.rel (0) target = $region5
    $region4: #{tpu_custom_call.1} parent=1 // pred_region
      %s19 = ssub.s32 512, 512
      %20 = vsyncadd [#allocation3], %s19
      %s21 = sshll.u32 [#allocation2], 4
      %s22 = int_to_ptr.vmem [resolvable:$true] %s21
      %27 = dma.hbm_to_vmem [thread:$0]  %s0, 512, %s22, [#allocation3], 64, 64, 4
    $region5: #{tpu_custom_call.1} parent=1 // pred_fallthru
      _
    // Predicated region
    $region6: #{tpu_custom_call.1} parent=1 // pred_check
      _
    $region7: #{tpu_custom_call.1} parent=1 // pred_check_branch
      %29 = sbr.rel (0) target = $region9
    $region8: #{tpu_custom_call.1} parent=1 // pred_region
      %s31 = ssub.s32 1024, 1024
      %32 = vsyncadd [#allocation6], %s31
      %s33 = sshll.u32 [#allocation5], 4
      %s34 = int_to_ptr.vmem [resolvable:$true] %s33
      %39 = dma.hbm_to_vmem [thread:$0]  %s1, 1024, %s34, [#allocation6], 64, 64, 4
    $region9: #{tpu_custom_call.1} parent=1 // pred_fallthru
      _
    // Predicated region
    $region10: #{tpu_custom_call.1} parent=1 // pred_check
      _
    $region11: #{tpu_custom_call.1} parent=1 // pred_check_branch
      %41 = sbr.rel (0) target = $region13
    $region12: #{tpu_custom_call.1} parent=1 // pred_region
      _
    $region13: #{tpu_custom_call.1} parent=1 // pred_fallthru
      _
    // Predicated region
    $region14: #{tpu_custom_call.1} parent=1 // pred_check
      _
    $region15: #{tpu_custom_call.1} parent=1 // pred_check_branch
      %43 = sbr.rel (0) target = $region17
    $region16: #{tpu_custom_call.1} parent=1 // pred_region
      %s45 = ssub.s32 1024, 1024
      %46 = vsyncadd [#allocation6], %s45
      %s47 = sshll.u32 [#allocation7], 4
      %s48 = int_to_ptr.vmem [resolvable:$true] %s47
      %53 = dma.hbm_to_vmem [thread:$0]  %s3, 1024, %s48, [#allocation6], 64, 64, 4
    $region17: #{tpu_custom_call.1} parent=1 // pred_fallthru
      _
    // Predicated region
    $region18: #{tpu_custom_call.1} parent=1 // pred_check
      _
    $region19: #{tpu_custom_call.1} parent=1 // pred_check_branch
      %55 = sbr.rel (0) target = $region21
    $region20: #{tpu_custom_call.1} parent=1 // pred_region
      _
    $region21: #{tpu_custom_call.1} parent=1 // pred_fallthru
      _
    // Predicated region
    $region22: #{tpu_custom_call.1} parent=1 // pred_check
      _
    $region23: #{tpu_custom_call.1} parent=1 // pred_check_branch
      %57 = sbr.rel (0) target = $region25
    $region24: #{tpu_custom_call.1} parent=1 // pred_region
      %s59 = ssub.s32 1024, 1024
      %60 = vsyncadd [#allocation9], %s59
      %s61 = sshll.u32 [#allocation8], 4
      %s62 = int_to_ptr.vmem [resolvable:$true] %s61
      %67 = dma.hbm_to_vmem [thread:$0]  %s5, 1024, %s62, [#allocation9], 64, 64, 4
    $region25: #{tpu_custom_call.1} parent=1 // pred_fallthru
      _
    // Predicated region
    $region26: #{tpu_custom_call.1} parent=1 // pred_check
      _
    $region27: #{tpu_custom_call.1} parent=1 // pred_check_branch
      %69 = sbr.rel (0) target = $region29
    $region28: #{tpu_custom_call.1} parent=1 // pred_region
      _
    $region29: #{tpu_custom_call.1} parent=1 // pred_fallthru
      _
    // Predicated region
    $region30: #{tpu_custom_call.1} parent=1 // pred_check
      _
    $region31: #{tpu_custom_call.1} parent=1 // pred_check_branch
      %71 = sbr.rel (0) target = $region33
    $region32: #{tpu_custom_call.1} parent=1 // pred_region
      %72 = dma.done [#allocation3], 512
    $region33: #{tpu_custom_call.1} parent=1 // pred_fallthru
      _
    // Predicated region
    $region34: #{tpu_custom_call.1} parent=1 // pred_check
      _
    $region35: #{tpu_custom_call.1} parent=1 // pred_check_branch
      %74 = sbr.rel (0) target = $region37
    $region36: #{tpu_custom_call.1} parent=1 // pred_region
      %75 = dma.done [#allocation6], 1024
    $region37: #{tpu_custom_call.1} parent=1 // pred_fallthru
      _
    // Predicated region
    $region38: #{tpu_custom_call.1} parent=1 // pred_check
      _
    $region39: #{tpu_custom_call.1} parent=1 // pred_check_branch
      %77 = sbr.rel (0) target = $region41
    $region40: #{tpu_custom_call.1} parent=1 // pred_region
      %78 = dma.done [#allocation6], 1024
    $region41: #{tpu_custom_call.1} parent=1 // pred_fallthru
      _
    // Predicated region
    $region42: #{tpu_custom_call.1} parent=1 // pred_check
      _
    $region43: #{tpu_custom_call.1} parent=1 // pred_check_branch
      %80 = sbr.rel (0) target = $region45
    $region44: #{tpu_custom_call.1} parent=1 // pred_region
      %81 = dma.done [#allocation9], 1024
    $region45: #{tpu_custom_call.1} parent=1 // pred_fallthru
      _
    %v83 = vld [vmem:[#allocation2] sm:$0xf]
    %v84 = vld [vmem:[#allocation2 + $0x4] sm:$0xf]
    %v85 = vld [vmem:[#allocation2 + $0x8] sm:$0xf]
    %v86 = vld [vmem:[#allocation2 + $0xc] sm:$0xf]
    %v87 = vld [vmem:[#allocation2 + $0x10] sm:$0xf]
    %v88 = vld [vmem:[#allocation2 + $0x14] sm:$0xf]
    %v89 = vld [vmem:[#allocation2 + $0x18] sm:$0xf]
    %v90 = vld [vmem:[#allocation2 + $0x1c] sm:$0xf]
    %v91 = vld [vmem:[#allocation5] sm:$0xf]
    %v92 = vld [vmem:[#allocation5 + $0x4] sm:$0xf]
    %v93 = vld [vmem:[#allocation5 + $0x8] sm:$0xf]
    %v94 = vld [vmem:[#allocation5 + $0xc] sm:$0xf]
    %v95 = vld [vmem:[#allocation5 + $0x10] sm:$0xf]
    %v96 = vld [vmem:[#allocation5 + $0x14] sm:$0xf]
    %v97 = vld [vmem:[#allocation5 + $0x18] sm:$0xf]
    %v98 = vld [vmem:[#allocation5 + $0x1c] sm:$0xf]
    %v99 = vld [vmem:[#allocation5 + $0x20] sm:$0xf]
    %v100 = vld [vmem:[#allocation5 + $0x24] sm:$0xf]
    %v101 = vld [vmem:[#allocation5 + $0x28] sm:$0xf]
    %v102 = vld [vmem:[#allocation5 + $0x2c] sm:$0xf]
    %v103 = vld [vmem:[#allocation5 + $0x30] sm:$0xf]
    %v104 = vld [vmem:[#allocation5 + $0x34] sm:$0xf]
    %v105 = vld [vmem:[#allocation5 + $0x38] sm:$0xf]
    %v106 = vld [vmem:[#allocation5 + $0x3c] sm:$0xf]
    %v107 = vld [vmem:[%s2] sm:$0x1]
    %v109 = vlaneseq
    %v110 = vshrl.u32 %v109, 7
    %v111 = vsub.s32 0, %v110
    %v112 = vrot.slane %v107, %v111
    %v122 = vunpack.c.l.b16 %v83
    %v123 = vunpack.c.l.b16 %v84
    %v124 = vunpack.c.l.b16 %v85
    %v125 = vunpack.c.l.b16 %v86
    %v126 = vunpack.c.l.b16 %v87
    %v127 = vunpack.c.l.b16 %v88
    %v128 = vunpack.c.l.b16 %v89
    %v129 = vunpack.c.l.b16 %v90
    %v130 = vpack.c.b16 %v123, %v122
    %v131 = vpack.c.b16 %v125, %v124
    %v132 = vpack.c.b16 %v127, %v126
    %v133 = vpack.c.b16 %v129, %v128
    %v154 = vunpack.c.l.b16 %v91
    %v155 = vunpack.c.l.b16 %v92
    %v156 = vunpack.c.l.b16 %v93
    %v157 = vunpack.c.l.b16 %v94
    %v158 = vunpack.c.l.b16 %v95
    %v159 = vunpack.c.l.b16 %v96
    %v160 = vunpack.c.l.b16 %v97
    %v161 = vunpack.c.l.b16 %v98
    %v162 = vunpack.c.l.b16 %v99
    %v163 = vunpack.c.l.b16 %v100
    %v164 = vunpack.c.l.b16 %v101
    %v165 = vunpack.c.l.b16 %v102
    %v166 = vunpack.c.l.b16 %v103
    %v167 = vunpack.c.l.b16 %v104
    %v168 = vunpack.c.l.b16 %v105
    %v169 = vunpack.c.l.b16 %v106
    %v170 = vpack.c.b16 %v155, %v154
    %v171 = vpack.c.b16 %v157, %v156
    %v172 = vpack.c.b16 %v159, %v158
    %v173 = vpack.c.b16 %v161, %v160
    %v174 = vpack.c.b16 %v163, %v162
    %v175 = vpack.c.b16 %v165, %v164
    %v176 = vpack.c.b16 %v167, %v166
    %v177 = vpack.c.b16 %v169, %v168
    %186 = vmatprep.subr.bf16.mxu0 0
    %187 = vmatpush1.bf16.msra.mxu0 %v170
    %188 = vmatprep.subr.bf16.mxu0 0
    %189 = vmatpush1.bf16.msra.mxu0 %v171
    %190 = vmatprep.subr.bf16.mxu0 0
    %191 = vmatpush1.bf16.msra.mxu0 %v172
    %192 = vmatprep.subr.bf16.mxu0 0
    %193 = vmatpush1.bf16.msra.mxu0 %v173
    %194 = vmatprep.subr.bf16.mxu0 0
    %195 = vmatpush1.bf16.msra.mxu0 %v174
    %196 = vmatprep.subr.bf16.mxu0 0
    %197 = vmatpush1.bf16.msra.mxu0 %v175
    %198 = vmatprep.subr.bf16.mxu0 0
    %199 = vmatpush1.bf16.msra.mxu0 %v176
    %200 = vmatprep.subr.bf16.mxu0 0
    %201 = vmatpush1.bf16.msra.mxu0 %v177
    %202 = vmatprep.subr.bf16.mxu0 0
    %203 = vmatpush1.bf16.msra.mxu0 0
    %204 = vmatprep.subr.bf16.mxu0 0
    %205 = vmatpush1.bf16.msra.mxu0 0
    %206 = vmatprep.subr.bf16.mxu0 0
    %207 = vmatpush1.bf16.msra.mxu0 0
    %208 = vmatprep.subr.bf16.mxu0 0
    %209 = vmatpush1.bf16.msra.mxu0 0
    %210 = vmatprep.subr.bf16.mxu0 0
    %211 = vmatpush1.bf16.msra.mxu0 0
    %212 = vmatprep.subr.bf16.mxu0 0
    %213 = vmatpush1.bf16.msra.mxu0 0
    %214 = vmatprep.subr.bf16.mxu0 0
    %215 = vmatpush1.bf16.msra.mxu0 0
    %216 = vmatprep.subr.bf16.mxu0 0
    %217 = vmatpush1.bf16.msra.mxu0 0
    %218 = vmatprep.mubr.bf16.mxu0 0
    %219 = vmatmul.mubr.bf16.gmra.mrb[0].mxu0 %v130
    %v220 = vpop.f32.mrb[0].mxu0
    %v221 = vadd.f32 %v112, %v220
    %v222 = vpop.f32.mrb[0].mxu0
    %v223 = vpop.f32.mrb[0].mxu0
    %v224 = vadd.f32 %v112, %v223
    %v225 = vpop.f32.mrb[0].mxu0
    %226 = vmatprep.mubr.bf16.mxu0 0
    %227 = vmatmul.mubr.bf16.gmra.mrb[0].mxu0 %v131
    %v228 = vpop.f32.mrb[0].mxu0
    %v229 = vadd.f32 %v112, %v228
    %v230 = vpop.f32.mrb[0].mxu0
    %v231 = vpop.f32.mrb[0].mxu0
    %v232 = vadd.f32 %v112, %v231
    %v233 = vpop.f32.mrb[0].mxu0
    %234 = vmatprep.mubr.bf16.mxu0 0
    %235 = vmatmul.mubr.bf16.gmra.mrb[0].mxu0 %v132
    %v236 = vpop.f32.mrb[0].mxu0
    %v237 = vadd.f32 %v112, %v236
    %v238 = vpop.f32.mrb[0].mxu0
    %v239 = vpop.f32.mrb[0].mxu0
    %v240 = vadd.f32 %v112, %v239
    %v241 = vpop.f32.mrb[0].mxu0
    %242 = vmatprep.mubr.bf16.mxu0 0
    %243 = vmatmul.mubr.bf16.gmra.mrb[0].mxu0 %v133
    %v244 = vpop.f32.mrb[0].mxu0
    %v245 = vadd.f32 %v112, %v244
    %v246 = vpop.f32.mrb[0].mxu0
    %v247 = vpop.f32.mrb[0].mxu0
    %v248 = vadd.f32 %v112, %v247
    %v249 = vpop.f32.mrb[0].mxu0
    %250 = vdwg.mxu0
    %vm251 = vcmp.gt.f32.partialorder %v221, 0.0
    %vm252 = vcmp.gt.f32.partialorder %v224, 0.0
    %vm253 = vcmp.gt.f32.partialorder %v229, 0.0
    %vm254 = vcmp.gt.f32.partialorder %v232, 0.0
    %vm255 = vcmp.gt.f32.partialorder %v237, 0.0
    %vm256 = vcmp.gt.f32.partialorder %v240, 0.0
    %vm257 = vcmp.gt.f32.partialorder %v245, 0.0
    %vm258 = vcmp.gt.f32.partialorder %v248, 0.0
    %v259 = vmul.f32 %v221, 0.2
    %v260 = vmul.f32 %v224, 0.2
    %v261 = vmul.f32 %v229, 0.2
    %v262 = vmul.f32 %v232, 0.2
    %v263 = vmul.f32 %v237, 0.2
    %v264 = vmul.f32 %v240, 0.2
    %v265 = vmul.f32 %v245, 0.2
    %v266 = vmul.f32 %v248, 0.2
    %v267 = vsel %vm251, %v221, %v259
    %v268 = vsel %vm252, %v224, %v260
    %v269 = vsel %vm253, %v229, %v261
    %v270 = vsel %vm254, %v232, %v262
    %v271 = vsel %vm255, %v237, %v263
    %v272 = vsel %vm256, %v240, %v264
    %v273 = vsel %vm257, %v245, %v265
    %v274 = vsel %vm258, %v248, %v266
    %v275 = vpack.c.bf16 %v268, %v267
    %v276 = vpack.c.bf16 %v270, %v269
    %v277 = vpack.c.bf16 %v272, %v271
    %v278 = vpack.c.bf16 %v274, %v273
    %v279 = vld [vmem:[#allocation7] sm:$0xf]
    %v280 = vld [vmem:[#allocation7 + $0x4] sm:$0xf]
    %v281 = vld [vmem:[#allocation7 + $0x8] sm:$0xf]
    %v282 = vld [vmem:[#allocation7 + $0xc] sm:$0xf]
    %v283 = vld [vmem:[#allocation7 + $0x10] sm:$0xf]
    %v284 = vld [vmem:[#allocation7 + $0x14] sm:$0xf]
    %v285 = vld [vmem:[#allocation7 + $0x18] sm:$0xf]
    %v286 = vld [vmem:[#allocation7 + $0x1c] sm:$0xf]
    %v287 = vld [vmem:[#allocation7 + $0x20] sm:$0xf]
    %v288 = vld [vmem:[#allocation7 + $0x24] sm:$0xf]
    %v289 = vld [vmem:[#allocation7 + $0x28] sm:$0xf]
    %v290 = vld [vmem:[#allocation7 + $0x2c] sm:$0xf]
    %v291 = vld [vmem:[#allocation7 + $0x30] sm:$0xf]
    %v292 = vld [vmem:[#allocation7 + $0x34] sm:$0xf]
    %v293 = vld [vmem:[#allocation7 + $0x38] sm:$0xf]
    %v294 = vld [vmem:[#allocation7 + $0x3c] sm:$0xf]
    %v295 = vld [vmem:[%s4] sm:$0x1]
    %v297 = vlaneseq
    %v298 = vshrl.u32 %v297, 7
    %v299 = vsub.s32 0, %v298
    %v300 = vrot.slane %v295, %v299
    %v318 = vunpack.c.l.b16 %v279
    %v319 = vunpack.c.l.b16 %v280
    %v320 = vunpack.c.l.b16 %v281
    %v321 = vunpack.c.l.b16 %v282
    %v322 = vunpack.c.l.b16 %v283
    %v323 = vunpack.c.l.b16 %v284
    %v324 = vunpack.c.l.b16 %v285
    %v325 = vunpack.c.l.b16 %v286
    %v326 = vunpack.c.l.b16 %v287
    %v327 = vunpack.c.l.b16 %v288
    %v328 = vunpack.c.l.b16 %v289
    %v329 = vunpack.c.l.b16 %v290
    %v330 = vunpack.c.l.b16 %v291
    %v331 = vunpack.c.l.b16 %v292
    %v332 = vunpack.c.l.b16 %v293
    %v333 = vunpack.c.l.b16 %v294
    %v334 = vpack.c.b16 %v319, %v318
    %v335 = vpack.c.b16 %v321, %v320
    %v336 = vpack.c.b16 %v323, %v322
    %v337 = vpack.c.b16 %v325, %v324
    %v338 = vpack.c.b16 %v327, %v326
    %v339 = vpack.c.b16 %v329, %v328
    %v340 = vpack.c.b16 %v331, %v330
    %v341 = vpack.c.b16 %v333, %v332
    %350 = vmatprep.subr.bf16.mxu0 0
    %351 = vmatpush1.bf16.msra.mxu0 %v334
    %352 = vmatprep.subr.bf16.mxu0 0
    %353 = vmatpush1.bf16.msra.mxu0 %v335
    %354 = vmatprep.subr.bf16.mxu0 0
    %355 = vmatpush1.bf16.msra.mxu0 %v336
    %356 = vmatprep.subr.bf16.mxu0 0
    %357 = vmatpush1.bf16.msra.mxu0 %v337
    %358 = vmatprep.subr.bf16.mxu0 0
    %359 = vmatpush1.bf16.msra.mxu0 %v338
    %360 = vmatprep.subr.bf16.mxu0 0
    %361 = vmatpush1.bf16.msra.mxu0 %v339
    %362 = vmatprep.subr.bf16.mxu0 0
    %363 = vmatpush1.bf16.msra.mxu0 %v340
    %364 = vmatprep.subr.bf16.mxu0 0
    %365 = vmatpush1.bf16.msra.mxu0 %v341
    %366 = vmatprep.subr.bf16.mxu0 0
    %367 = vmatpush1.bf16.msra.mxu0 0
    %368 = vmatprep.subr.bf16.mxu0 0
    %369 = vmatpush1.bf16.msra.mxu0 0
    %370 = vmatprep.subr.bf16.mxu0 0
    %371 = vmatpush1.bf16.msra.mxu0 0
    %372 = vmatprep.subr.bf16.mxu0 0
    %373 = vmatpush1.bf16.msra.mxu0 0
    %374 = vmatprep.subr.bf16.mxu0 0
    %375 = vmatpush1.bf16.msra.mxu0 0
    %376 = vmatprep.subr.bf16.mxu0 0
    %377 = vmatpush1.bf16.msra.mxu0 0
    %378 = vmatprep.subr.bf16.mxu0 0
    %379 = vmatpush1.bf16.msra.mxu0 0
    %380 = vmatprep.subr.bf16.mxu0 0
    %381 = vmatpush1.bf16.msra.mxu0 0
    %382 = vmatprep.mubr.bf16.mxu0 0
    %383 = vmatmul.mubr.bf16.gmra.mrb[0].mxu0 %v275
    %v384 = vpop.f32.mrb[0].mxu0
    %v385 = vadd.f32 %v300, %v384
    %v386 = vpop.f32.mrb[0].mxu0
    %v387 = vpop.f32.mrb[0].mxu0
    %v388 = vadd.f32 %v300, %v387
    %v389 = vpop.f32.mrb[0].mxu0
    %390 = vmatprep.mubr.bf16.mxu0 0
    %391 = vmatmul.mubr.bf16.gmra.mrb[0].mxu0 %v276
    %v392 = vpop.f32.mrb[0].mxu0
    %v393 = vadd.f32 %v300, %v392
    %v394 = vpop.f32.mrb[0].mxu0
    %v395 = vpop.f32.mrb[0].mxu0
    %v396 = vadd.f32 %v300, %v395
    %v397 = vpop.f32.mrb[0].mxu0
    %398 = vmatprep.mubr.bf16.mxu0 0
    %399 = vmatmul.mubr.bf16.gmra.mrb[0].mxu0 %v277
    %v400 = vpop.f32.mrb[0].mxu0
    %v401 = vadd.f32 %v300, %v400
    %v402 = vpop.f32.mrb[0].mxu0
    %v403 = vpop.f32.mrb[0].mxu0
    %v404 = vadd.f32 %v300, %v403
    %v405 = vpop.f32.mrb[0].mxu0
    %406 = vmatprep.mubr.bf16.mxu0 0
    %407 = vmatmul.mubr.bf16.gmra.mrb[0].mxu0 %v278
    %v408 = vpop.f32.mrb[0].mxu0
    %v409 = vadd.f32 %v300, %v408
    %v410 = vpop.f32.mrb[0].mxu0
    %v411 = vpop.f32.mrb[0].mxu0
    %v412 = vadd.f32 %v300, %v411
    %v413 = vpop.f32.mrb[0].mxu0
    %414 = vdwg.mxu0
    %vm415 = vcmp.gt.f32.partialorder %v385, 0.0
    %vm416 = vcmp.gt.f32.partialorder %v388, 0.0
    %vm417 = vcmp.gt.f32.partialorder %v393, 0.0
    %vm418 = vcmp.gt.f32.partialorder %v396, 0.0
    %vm419 = vcmp.gt.f32.partialorder %v401, 0.0
    %vm420 = vcmp.gt.f32.partialorder %v404, 0.0
    %vm421 = vcmp.gt.f32.partialorder %v409, 0.0
    %vm422 = vcmp.gt.f32.partialorder %v412, 0.0
    %v423 = vmul.f32 %v385, 0.2
    %v424 = vmul.f32 %v388, 0.2
    %v425 = vmul.f32 %v393, 0.2
    %v426 = vmul.f32 %v396, 0.2
    %v427 = vmul.f32 %v401, 0.2
    %v428 = vmul.f32 %v404, 0.2
    %v429 = vmul.f32 %v409, 0.2
    %v430 = vmul.f32 %v412, 0.2
    %v431 = vsel %vm415, %v385, %v423
    %v432 = vsel %vm416, %v388, %v424
    %v433 = vsel %vm417, %v393, %v425
    %v434 = vsel %vm418, %v396, %v426
    %v435 = vsel %vm419, %v401, %v427
    %v436 = vsel %vm420, %v404, %v428
    %v437 = vsel %vm421, %v409, %v429
    %v438 = vsel %vm422, %v412, %v430
    %v439 = vpack.c.bf16 %v432, %v431
    %v440 = vpack.c.bf16 %v434, %v433
    %v441 = vpack.c.bf16 %v436, %v435
    %v442 = vpack.c.bf16 %v438, %v437
    %v443 = vld [vmem:[#allocation8] sm:$0xf]
    %v444 = vld [vmem:[#allocation8 + $0x4] sm:$0xf]
    %v445 = vld [vmem:[#allocation8 + $0x8] sm:$0xf]
    %v446 = vld [vmem:[#allocation8 + $0xc] sm:$0xf]
    %v447 = vld [vmem:[#allocation8 + $0x10] sm:$0xf]
    %v448 = vld [vmem:[#allocation8 + $0x14] sm:$0xf]
    %v449 = vld [vmem:[#allocation8 + $0x18] sm:$0xf]
    %v450 = vld [vmem:[#allocation8 + $0x1c] sm:$0xf]
    %v451 = vld [vmem:[#allocation8 + $0x20] sm:$0xf]
    %v452 = vld [vmem:[#allocation8 + $0x24] sm:$0xf]
    %v453 = vld [vmem:[#allocation8 + $0x28] sm:$0xf]
    %v454 = vld [vmem:[#allocation8 + $0x2c] sm:$0xf]
    %v455 = vld [vmem:[#allocation8 + $0x30] sm:$0xf]
    %v456 = vld [vmem:[#allocation8 + $0x34] sm:$0xf]
    %v457 = vld [vmem:[#allocation8 + $0x38] sm:$0xf]
    %v458 = vld [vmem:[#allocation8 + $0x3c] sm:$0xf]
    %v459 = vld [vmem:[%s6] sm:$0x1]
    %v461 = vlaneseq
    %v462 = vshrl.u32 %v461, 7
    %v463 = vsub.s32 0, %v462
    %v464 = vrot.slane %v459, %v463
    %v482 = vunpack.c.l.b16 %v443
    %v483 = vunpack.c.l.b16 %v444
    %v484 = vunpack.c.l.b16 %v445
    %v485 = vunpack.c.l.b16 %v446
    %v486 = vunpack.c.l.b16 %v447
    %v487 = vunpack.c.l.b16 %v448
    %v488 = vunpack.c.l.b16 %v449
    %v489 = vunpack.c.l.b16 %v450
    %v490 = vunpack.c.l.b16 %v451
    %v491 = vunpack.c.l.b16 %v452
    %v492 = vunpack.c.l.b16 %v453
    %v493 = vunpack.c.l.b16 %v454
    %v494 = vunpack.c.l.b16 %v455
    %v495 = vunpack.c.l.b16 %v456
    %v496 = vunpack.c.l.b16 %v457
    %v497 = vunpack.c.l.b16 %v458
    %v498 = vpack.c.b16 %v483, %v482
    %v499 = vpack.c.b16 %v485, %v484
    %v500 = vpack.c.b16 %v487, %v486
    %v501 = vpack.c.b16 %v489, %v488
    %v502 = vpack.c.b16 %v491, %v490
    %v503 = vpack.c.b16 %v493, %v492
    %v504 = vpack.c.b16 %v495, %v494
    %v505 = vpack.c.b16 %v497, %v496
    %514 = vmatprep.subr.bf16.mxu0 0
    %515 = vmatpush1.bf16.msra.mxu0 %v498
    %516 = vmatprep.subr.bf16.mxu0 0
    %517 = vmatpush1.bf16.msra.mxu0 %v499
    %518 = vmatprep.subr.bf16.mxu0 0
    %519 = vmatpush1.bf16.msra.mxu0 %v500
    %520 = vmatprep.subr.bf16.mxu0 0
    %521 = vmatpush1.bf16.msra.mxu0 %v501
    %522 = vmatprep.subr.bf16.mxu0 0
    %523 = vmatpush1.bf16.msra.mxu0 %v502
    %524 = vmatprep.subr.bf16.mxu0 0
    %525 = vmatpush1.bf16.msra.mxu0 %v503
    %526 = vmatprep.subr.bf16.mxu0 0
    %527 = vmatpush1.bf16.msra.mxu0 %v504
    %528 = vmatprep.subr.bf16.mxu0 0
    %529 = vmatpush1.bf16.msra.mxu0 %v505
    %530 = vmatprep.subr.bf16.mxu0 0
    %531 = vmatpush1.bf16.msra.mxu0 0
    %532 = vmatprep.subr.bf16.mxu0 0
    %533 = vmatpush1.bf16.msra.mxu0 0
    %534 = vmatprep.subr.bf16.mxu0 0
    %535 = vmatpush1.bf16.msra.mxu0 0
    %536 = vmatprep.subr.bf16.mxu0 0
    %537 = vmatpush1.bf16.msra.mxu0 0
    %538 = vmatprep.subr.bf16.mxu0 0
    %539 = vmatpush1.bf16.msra.mxu0 0
    %540 = vmatprep.subr.bf16.mxu0 0
    %541 = vmatpush1.bf16.msra.mxu0 0
    %542 = vmatprep.subr.bf16.mxu0 0
    %543 = vmatpush1.bf16.msra.mxu0 0
    %544 = vmatprep.subr.bf16.mxu0 0
    %545 = vmatpush1.bf16.msra.mxu0 0
    %546 = vmatprep.mubr.bf16.mxu0 0
    %547 = vmatmul.mubr.bf16.gmra.mrb[0].mxu0 %v439
    %v548 = vpop.f32.mrb[0].mxu0
    %v549 = vadd.f32 %v464, %v548
    %v550 = vpop.f32.mrb[0].mxu0
    %v551 = vpop.f32.mrb[0].mxu0
    %v552 = vadd.f32 %v464, %v551
    %v553 = vpop.f32.mrb[0].mxu0
    %554 = vmatprep.mubr.bf16.mxu0 0
    %555 = vmatmul.mubr.bf16.gmra.mrb[0].mxu0 %v440
    %v556 = vpop.f32.mrb[0].mxu0
    %v557 = vadd.f32 %v464, %v556
    %v558 = vpop.f32.mrb[0].mxu0
    %v559 = vpop.f32.mrb[0].mxu0
    %v560 = vadd.f32 %v464, %v559
    %v561 = vpop.f32.mrb[0].mxu0
    %562 = vmatprep.mubr.bf16.mxu0 0
    %563 = vmatmul.mubr.bf16.gmra.mrb[0].mxu0 %v441
    %v564 = vpop.f32.mrb[0].mxu0
    %v565 = vadd.f32 %v464, %v564
    %v566 = vpop.f32.mrb[0].mxu0
    %v567 = vpop.f32.mrb[0].mxu0
    %v568 = vadd.f32 %v464, %v567
    %v569 = vpop.f32.mrb[0].mxu0
    %570 = vmatprep.mubr.bf16.mxu0 0
    %571 = vmatmul.mubr.bf16.gmra.mrb[0].mxu0 %v442
    %v572 = vpop.f32.mrb[0].mxu0
    %v573 = vadd.f32 %v464, %v572
    %v574 = vpop.f32.mrb[0].mxu0
    %v575 = vpop.f32.mrb[0].mxu0
    %v576 = vadd.f32 %v464, %v575
    %v577 = vpop.f32.mrb[0].mxu0
    %578 = vdwg.mxu0
    %v579 = vsub.f32 0.0, %v549
    %v580 = vsub.f32 0.0, %v552
    %v581 = vsub.f32 0.0, %v557
    %v582 = vsub.f32 0.0, %v560
    %v583 = vsub.f32 0.0, %v565
    %v584 = vsub.f32 0.0, %v568
    %v585 = vsub.f32 0.0, %v573
    %v586 = vsub.f32 0.0, %v576
    %v587 = vmul.f32 %v579, 1.442695
    %v588 = vpow.pop %v587
    %v589 = vmul.f32 %v580, 1.442695
    %v590 = vpow.pop %v589
    %v591 = vmul.f32 %v581, 1.442695
    %v592 = vpow.pop %v591
    %v593 = vmul.f32 %v582, 1.442695
    %v594 = vpow.pop %v593
    %v595 = vmul.f32 %v583, 1.442695
    %v596 = vpow.pop %v595
    %v597 = vmul.f32 %v584, 1.442695
    %v598 = vpow.pop %v597
    %v599 = vmul.f32 %v585, 1.442695
    %v600 = vpow.pop %v599
    %v601 = vmul.f32 %v586, 1.442695
    %v602 = vpow.pop %v601
    %v603 = vadd.f32 %v588, 1.0
    %v604 = vadd.f32 %v590, 1.0
    %v605 = vadd.f32 %v592, 1.0
    %v606 = vadd.f32 %v594, 1.0
    %v607 = vadd.f32 %v596, 1.0
    %v608 = vadd.f32 %v598, 1.0
    %v609 = vadd.f32 %v600, 1.0
    %v610 = vadd.f32 %v602, 1.0
    %v611 = vrcp.pop %v603
    %v612 = vrcp.pop %v604
    %v613 = vrcp.pop %v605
    %v614 = vrcp.pop %v606
    %v615 = vrcp.pop %v607
    %v616 = vrcp.pop %v608
    %v617 = vrcp.pop %v609
    %v618 = vrcp.pop %v610
    %619 = vst [vmem:[#allocation10] sm:$0xff] %v611
    %620 = vst [vmem:[#allocation10 + $0x8] sm:$0xff] %v612
    %621 = vst [vmem:[#allocation10 + $0x10] sm:$0xff] %v613
    %622 = vst [vmem:[#allocation10 + $0x18] sm:$0xff] %v614
    %623 = vst [vmem:[#allocation10 + $0x20] sm:$0xff] %v615
    %624 = vst [vmem:[#allocation10 + $0x28] sm:$0xff] %v616
    %625 = vst [vmem:[#allocation10 + $0x30] sm:$0xff] %v617
    %626 = vst [vmem:[#allocation10 + $0x38] sm:$0xff] %v618
    // Predicated region
    $region46: #{tpu_custom_call.1} parent=1 // pred_check
      _
    $region47: #{tpu_custom_call.1} parent=1 // pred_check_branch
      %628 = sbr.rel (0) target = $region49
    $region48: #{tpu_custom_call.1} parent=1 // pred_region
      %s630 = ssub.s32 1024, 1024
      %631 = vsyncadd [#allocation4], %s630
      %s632 = sshll.u32 [#allocation10], 4
      %s633 = int_to_ptr.vmem [resolvable:$true] %s632
      %638 = dma.vmem_to_hbm [thread:$0]  %s633, 1024, %s7, [#allocation4], 128, 128, 8
    $region49: #{tpu_custom_call.1} parent=1 // pred_fallthru
      _
    // Predicated region
    $region50: #{tpu_custom_call.1} parent=1 // pred_check
      _
    $region51: #{tpu_custom_call.1} parent=1 // pred_check_branch
      %640 = sbr.rel (0) target = $region53
    $region52: #{tpu_custom_call.1} parent=1 // pred_region
      %641 = dma.done [#allocation4], 1024
    $region53: #{tpu_custom_call.1} parent=1 // pred_fallthru
      _
    %642 = vsyncpa [#allocation3], 1
    %643 = vsyncpa [#allocation6], 1
    %644 = vsyncpa [#allocation9], 1
    %645 = vsyncpa [#allocation4], 1

</llo_original>
